<compile_context>
chip_gen: v5e
topology: v5e:2x2
jax: 0.10.0
libtpu: 0.0.40
codegen_flags: <defaults>
</compile_context>

<pallas_src>
import functools

import jax
import jax.numpy as jnp
from jax.experimental import pallas as pl
from jax.experimental.pallas import tpu as pltpu

LN_EPS = 1e-5
BN_EPS = 1e-5


def _conformer_conv_kernel(
    x_ref,        # (1, tT, D)   input tile (one batch element, one T tile)
    halo_ref,     # (1, 2*pad, D) neighbour rows: [left halo; right halo]
    w1a_ref,      # (D, D) bf16  pointconv1 "a" half, LN gamma folded
    w1g_ref,      # (D, D) bf16  pointconv1 gate half, LN gamma folded
    b1a_ref,      # (1, D) f32   bias (LN beta folded)
    b1g_ref,      # (1, D) f32
    wdw_ref,      # (K, D) f32   depthwise weight, BN scale folded
    bn_sh_ref,    # (1, D) f32   BN shift (beta - mean*scale)
    w2_ref,       # (D, D) bf16  pointconv2 weight
    b2_ref,       # (1, D) f32
    o_ref,        # (1, tT, D)   output tile
    pad_buf,      # (pad_top + tT + pad_bot, D) f32 VMEM scratch
    *,
    kernel_size,
    pad_top,
):
    tT = x_ref.shape[1]
    D = x_ref.shape[2]
    K = kernel_size
    pad = (K - 1) // 2

    j = pl.program_id(1)
    n_t = pl.num_programs(1)

    def glu_of(rows_f32):
        # LayerNorm (affine folded into the weights) -> two bf16 MXU matmuls -> GLU
        mean = jnp.mean(rows_f32, axis=-1, keepdims=True)
        xc = rows_f32 - mean
        var = jnp.mean(xc * xc, axis=-1, keepdims=True)
        xn = (xc * jax.lax.rsqrt(var + LN_EPS)).astype(jnp.bfloat16)
        a = jnp.dot(xn, w1a_ref[...],
                    preferred_element_type=jnp.float32) + b1a_ref[...]
        g = jnp.dot(xn, w1g_ref[...],
                    preferred_element_type=jnp.float32) + b1g_ref[...]
        return a * jax.nn.sigmoid(g)

    # ---- main tile: residual + GLU(pointconv1(LN(x))) ----
    x_main = x_ref[0].astype(jnp.float32)                  # (tT, D)
    glu_main = glu_of(x_main)                              # (tT, D)
    # sublane-aligned store of the interior rows (pad_top is a multiple of 8)
    pad_buf[pl.ds(pad_top, tT), :] = glu_main

    # ---- halo rows (only 2*pad rows; zeroed at sequence boundaries) ----
    glu_halo = glu_of(halo_ref[0].astype(jnp.float32))     # (2*pad, D)
    left_ok = jnp.where(j > 0, 1.0, 0.0).astype(jnp.float32)
    right_ok = jnp.where(j < n_t - 1, 1.0, 0.0).astype(jnp.float32)
    pad_buf[pl.ds(pad_top - pad, pad), :] = glu_halo[:pad, :] * left_ok
    pad_buf[pl.ds(pad_top + tT, pad), :] = glu_halo[pad:, :] * right_ok

    # ---- depthwise conv along T ('SAME', bias-free, BN scale pre-folded) ----
    wdw = wdw_ref[...]                                     # (K, D)
    acc = pad_buf[pl.ds(pad_top - pad, tT), :] * wdw[0:1, :]
    for k in range(1, K):                                  # K static -> unrolled
        acc = acc + pad_buf[pl.ds(pad_top - pad + k, tT), :] * wdw[k:k + 1, :]

    # ---- BatchNorm shift (eval) + Swish ----
    y = acc + bn_sh_ref[...]
    sw = y * jax.nn.sigmoid(y)

    # ---- pointwise conv 2 (bf16 MXU) + residual (dropout == identity) ----
    out = jnp.dot(sw.astype(jnp.bfloat16), w2_ref[...],
                  preferred_element_type=jnp.float32) + b2_ref[...]
    o_ref[0] = (out + x_main).astype(o_ref.dtype)


def conformer_conv_module(x, params, *, kernel_size, block_t=512):
    """x: (B, T, D) float32. Returns (B, T, D). Eval-mode forward."""
    B, T, D = x.shape
    K = kernel_size
    pad = (K - 1) // 2
    assert pad >= 1, "kernel_size must be an odd number >= 3"
    assert T >= pad, "sequence length must be >= (kernel_size-1)//2"

    # --- choose T tile: multiple of 8, divides T, >= pad, <= block_t ---
    tT = T
    for cand in (512, 256, 128, 64, 32, 16, 8):
        if cand <= block_t and T % cand == 0 and cand >= pad:
            tT = cand
            break
    nT = T // tT
    pad_top = ((pad + 7) // 8) * 8
    pad_bot = ((pad + 7) // 8) * 8

    # --- fold LayerNorm affine into pointconv1, BatchNorm (eval) into depthwise ---
    f32 = jnp.float32
    ln_g = params["ln_gamma"].astype(f32)
    ln_b = params["ln_beta"].astype(f32)
    w1 = params["w1"].astype(f32)                          # (2D, D)
    b1 = params["b1"].astype(f32)                          # (2D,)
    w1a = (w1[:D].T) * ln_g[:, None]                       # (D, D)
    w1g = (w1[D:].T) * ln_g[:, None]                       # (D, D)
    b1a = (ln_b @ w1[:D].T + b1[:D]).reshape(1, D)
    b1g = (ln_b @ w1[D:].T + b1[D:]).reshape(1, D)

    bn_scale = params["bn_gamma"].astype(f32) * jax.lax.rsqrt(
        params["bn_var"].astype(f32) + BN_EPS)             # (D,)
    wdw = params["w_dw"].astype(f32).T * bn_scale[None, :]  # (K, D), tap-major
    bn_shift = (params["bn_beta"].astype(f32)
                - params["bn_mean"].astype(f32) * bn_scale).reshape(1, D)

    w2 = params["w2"].astype(f32).T                        # (D, D)
    b2 = params["b2"].astype(f32).reshape(1, D)

    # bf16 weights for the MXU (activations cast in-kernel; f32 accumulate)
    w1a_bf = w1a.astype(jnp.bfloat16)
    w1g_bf = w1g.astype(jnp.bfloat16)
    w2_bf = w2.astype(jnp.bfloat16)

    # --- per-tile halo rows: [last `pad` rows of prev tile ; first `pad` of next] ---
    xt = x.reshape(B, nT, tT, D)
    zrow = jnp.zeros((B, 1, pad, D), x.dtype)
    left = jnp.concatenate([zrow, xt[:, :-1, tT - pad:, :]], axis=1)   # (B,nT,pad,D)
    right = jnp.concatenate([xt[:, 1:, :pad, :], zrow], axis=1)        # (B,nT,pad,D)
    halo = jnp.concatenate([left, right], axis=2).reshape(B * nT, 2 * pad, D)

    def const_spec(shape):
        return pl.BlockSpec(shape, lambda b, j: (0,) * len(shape))

    kernel = functools.partial(_conformer_conv_kernel,
                               kernel_size=K, pad_top=pad_top)
    return pl.pallas_call(
        kernel,
        out_shape=jax.ShapeDtypeStruct((B, T, D), x.dtype),
        grid_spec=pltpu.PrefetchScalarGridSpec(
            num_scalar_prefetch=0,
            grid=(B, nT),
            in_specs=[
                pl.BlockSpec((1, tT, D), lambda b, j: (b, j, 0)),          # x tile
                pl.BlockSpec((1, 2 * pad, D),
                             lambda b, j, nT=nT: (b * nT + j, 0, 0)),      # halo rows
                const_spec((D, D)),        # w1a (bf16)
                const_spec((D, D)),        # w1 gate (bf16)
                const_spec((1, D)),        # b1a
                const_spec((1, D)),        # b1 gate
                const_spec((K, D)),        # depthwise weight (BN folded)
                const_spec((1, D)),        # BN shift
                const_spec((D, D)),        # w2 (bf16)
                const_spec((1, D)),        # b2
            ],
            out_specs=pl.BlockSpec((1, tT, D), lambda b, j: (b, j, 0)),
            scratch_shapes=[pltpu.VMEM((pad_top + tT + pad_bot, D), jnp.float32)],
        ),
        compiler_params=pltpu.CompilerParams(
            dimension_semantics=("parallel", "parallel")),
    )(x, halo, w1a_bf, w1g_bf, b1a, b1g, wdw, bn_shift, w2_bf, b2)


def _reference(x, params, *, kernel_size):
    """Pure-JAX f32 reference (eval mode) for a correctness sanity check."""
    K = kernel_size
    pad = (K - 1) // 2
    D = x.shape[-1]
    mean = jnp.mean(x, axis=-1, keepdims=True)
    var = jnp.mean((x - mean) ** 2, axis=-1, keepdims=True)
    xn = (x - mean) / jnp.sqrt(var + LN_EPS)
    xn = xn * params["ln_gamma"] + params["ln_beta"]
    h = jnp.einsum("btd,od->bto", xn, params["w1"]) + params["b1"]
    glu = h[..., :D] * jax.nn.sigmoid(h[..., D:])
    gp = jnp.pad(glu, ((0, 0), (pad, pad), (0, 0)))
    dw = sum(gp[:, k:k + x.shape[1], :] * params["w_dw"][:, k] for k in range(K))
    bn = (dw - params["bn_mean"]) / jnp.sqrt(params["bn_var"] + BN_EPS)
    bn = bn * params["bn_gamma"] + params["bn_beta"]
    sw = bn * jax.nn.sigmoid(bn)
    out = jnp.einsum("btd,od->bto", sw, params["w2"]) + params["b2"]
    return out + x


def make_params(key, in_channels, kernel_size):
    D, K = in_channels, kernel_size
    ks = jax.random.split(key, 8)
    s = 0.1
    return {
        "ln_gamma": jnp.ones((D,), jnp.float32),
        "ln_beta": jnp.zeros((D,), jnp.float32),
        "w1": s * jax.random.normal(ks[0], (2 * D, D), jnp.float32),   # Conv1d(D,2D,1)
        "b1": s * jax.random.normal(ks[1], (2 * D,), jnp.float32),
        "w_dw": s * jax.random.normal(ks[2], (D, K), jnp.float32),     # Conv1d(D,D,K,groups=D)
        "bn_gamma": jnp.ones((D,), jnp.float32),
        "bn_beta": jnp.zeros((D,), jnp.float32),
        "bn_mean": jnp.zeros((D,), jnp.float32),
        "bn_var": jnp.ones((D,), jnp.float32),
        "w2": s * jax.random.normal(ks[3], (D, D), jnp.float32),       # Conv1d(D,D,1)
        "b2": s * jax.random.normal(ks[4], (D,), jnp.float32),
    }


if __name__ == "__main__":
    KERNEL_SIZE = 7  # odd -> 'SAME' padding
    key = jax.random.PRNGKey(0)
    k_x, k_p, k_x2 = jax.random.split(key, 3)

    # Test 1: single T tile per batch element.
    B, T, D = 2, 16, 32
    x = jax.random.normal(k_x, (B, T, D), jnp.float32)
    params = make_params(k_p, D, KERNEL_SIZE)
    out = jax.block_until_ready(
        conformer_conv_module(x, params, kernel_size=KERNEL_SIZE))
    ref = _reference(x, params, kernel_size=KERNEL_SIZE)
    assert out.shape == (B, T, D)
    assert jnp.allclose(out, ref, rtol=2e-2, atol=2e-2), "mismatch vs reference (1 tile)"

    # Test 2: multiple T tiles (exercises the halo / boundary path).
    T2 = 32
    x2 = jax.random.normal(k_x2, (B, T2, D), jnp.float32)
    out2 = jax.block_until_ready(
        conformer_conv_module(x2, params, kernel_size=KERNEL_SIZE, block_t=8))
    ref2 = _reference(x2, params, kernel_size=KERNEL_SIZE)
    assert out2.shape == (B, T2, D)
    assert jnp.allclose(out2, ref2, rtol=2e-2, atol=2e-2), "mismatch vs reference (tiled)"

    print("KERNEL_OK")
</pallas_src>

<mosaic_0001>
module attributes {stable_mosaic.version = 11 : i64} {
  func.func @_conformer_conv_kernel(%arg0: i32, %arg1: i32, %arg2: memref<1x16x32xf32, #tpu.memory_space<vmem>>, %arg3: memref<1x6x32xf32, #tpu.memory_space<vmem>>, %arg4: memref<32x32xbf16, #tpu.memory_space<vmem>>, %arg5: memref<32x32xbf16, #tpu.memory_space<vmem>>, %arg6: memref<1x32xf32, #tpu.memory_space<vmem>>, %arg7: memref<1x32xf32, #tpu.memory_space<vmem>>, %arg8: memref<7x32xf32, #tpu.memory_space<vmem>>, %arg9: memref<1x32xf32, #tpu.memory_space<vmem>>, %arg10: memref<32x32xbf16, #tpu.memory_space<vmem>>, %arg11: memref<1x32xf32, #tpu.memory_space<vmem>>, %arg12: memref<1x16x32xf32, #tpu.memory_space<vmem>>, %arg13: memref<32x32xf32, #tpu.memory_space<vmem>>) attributes {dimension_semantics = [#tpu.dimension_semantics<parallel>, #tpu.dimension_semantics<parallel>], iteration_bounds = array<i64: 2, 1>, scalar_prefetch = 0 : i64, scratch_operands = 1 : i64, tpu.core_type = #tpu.core_type<tc>, window_params = [{transform_indices = @transform_0, window_bounds = array<i64: 1, 16, 32>}, {transform_indices = @transform_1, window_bounds = array<i64: 1, 6, 32>}, {pipeline_mode = #tpu.pipeline_mode<synchronous>, transform_indices = @transform_2, window_bounds = array<i64: 32, 32>}, {pipeline_mode = #tpu.pipeline_mode<synchronous>, transform_indices = @transform_3, window_bounds = array<i64: 32, 32>}, {pipeline_mode = #tpu.pipeline_mode<synchronous>, transform_indices = @transform_4, window_bounds = array<i64: 1, 32>}, {pipeline_mode = #tpu.pipeline_mode<synchronous>, transform_indices = @transform_5, window_bounds = array<i64: 1, 32>}, {pipeline_mode = #tpu.pipeline_mode<synchronous>, transform_indices = @transform_6, window_bounds = array<i64: 7, 32>}, {pipeline_mode = #tpu.pipeline_mode<synchronous>, transform_indices = @transform_7, window_bounds = array<i64: 1, 32>}, {pipeline_mode = #tpu.pipeline_mode<synchronous>, transform_indices = @transform_8, window_bounds = array<i64: 32, 32>}, {pipeline_mode = #tpu.pipeline_mode<synchronous>, transform_indices = @transform_9, window_bounds = array<i64: 1, 32>}, {transform_indices = @transform_10, window_bounds = array<i64: 1, 16, 32>}]} {
    %c0 = arith.constant 0 : index
    %c0_0 = arith.constant 0 : index
    %c0_1 = arith.constant 0 : index
    %0 = vector.load %arg2[%c0, %c0_0, %c0_1] : memref<1x16x32xf32, #tpu.memory_space<vmem>>, vector<1x16x32xf32>
    %1 = vector.shape_cast %0 : vector<1x16x32xf32> to vector<16x32xf32>
    %cst = arith.constant dense<0.000000e+00> : vector<16xf32>
    %2 = vector.multi_reduction <add>, %1, %cst [1] : vector<16x32xf32> to vector<16xf32>
    %3 = vector.shape_cast %2 : vector<16xf32> to vector<16x1xf32>
    %cst_2 = arith.constant 3.200000e+01 : f32
    %4 = vector.broadcast %cst_2 : f32 to vector<16x1xf32>
    %5 = arith.divf %3, %4 : vector<16x1xf32>
    %6 = vector.broadcast %5 : vector<16x1xf32> to vector<16x32xf32>
    %7 = arith.subf %1, %6 : vector<16x32xf32>
    %8 = arith.mulf %7, %7 : vector<16x32xf32>
    %cst_3 = arith.constant dense<0.000000e+00> : vector<16xf32>
    %9 = vector.multi_reduction <add>, %8, %cst_3 [1] : vector<16x32xf32> to vector<16xf32>
    %10 = vector.shape_cast %9 : vector<16xf32> to vector<16x1xf32>
    %cst_4 = arith.constant 3.200000e+01 : f32
    %11 = vector.broadcast %cst_4 : f32 to vector<16x1xf32>
    %12 = arith.divf %10, %11 : vector<16x1xf32>
    %cst_5 = arith.constant 9.99999974E-6 : f32
    %13 = vector.broadcast %cst_5 : f32 to vector<16x1xf32>
    %14 = arith.addf %12, %13 : vector<16x1xf32>
    %15 = math.rsqrt %14 : vector<16x1xf32>
    %16 = vector.broadcast %15 : vector<16x1xf32> to vector<16x32xf32>
    %17 = arith.mulf %7, %16 : vector<16x32xf32>
    %18 = arith.truncf %17 : vector<16x32xf32> to vector<16x32xbf16>
    %c0_6 = arith.constant 0 : index
    %c0_7 = arith.constant 0 : index
    %19 = vector.load %arg4[%c0_6, %c0_7] : memref<32x32xbf16, #tpu.memory_space<vmem>>, vector<32x32xbf16>
    %cst_8 = arith.constant dense<0.000000e+00> : vector<16x32xf32>
    %20 = tpu.matmul %18, %19, %cst_8 {dimension_numbers = #tpu.dot_dimension_numbers<[1], [0], [0], [1], [0, 0, 1, 1], [], []>} : vector<16x32xbf16>, vector<32x32xbf16>, vector<16x32xf32> -> vector<16x32xf32>
    %c0_9 = arith.constant 0 : index
    %c0_10 = arith.constant 0 : index
    %21 = vector.load %arg6[%c0_9, %c0_10] : memref<1x32xf32, #tpu.memory_space<vmem>>, vector<1x32xf32>
    %22 = vector.broadcast %21 : vector<1x32xf32> to vector<16x32xf32>
    %23 = arith.addf %20, %22 : vector<16x32xf32>
    %c0_11 = arith.constant 0 : index
    %c0_12 = arith.constant 0 : index
    %24 = vector.load %arg5[%c0_11, %c0_12] : memref<32x32xbf16, #tpu.memory_space<vmem>>, vector<32x32xbf16>
    %cst_13 = arith.constant dense<0.000000e+00> : vector<16x32xf32>
    %25 = tpu.matmul %18, %24, %cst_13 {dimension_numbers = #tpu.dot_dimension_numbers<[1], [0], [0], [1], [0, 0, 1, 1], [], []>} : vector<16x32xbf16>, vector<32x32xbf16>, vector<16x32xf32> -> vector<16x32xf32>
    %c0_14 = arith.constant 0 : index
    %c0_15 = arith.constant 0 : index
    %26 = vector.load %arg7[%c0_14, %c0_15] : memref<1x32xf32, #tpu.memory_space<vmem>>, vector<1x32xf32>
    %27 = vector.broadcast %26 : vector<1x32xf32> to vector<16x32xf32>
    %28 = arith.addf %25, %27 : vector<16x32xf32>
    %29 = arith.negf %28 : vector<16x32xf32>
    %30 = math.exp %29 : vector<16x32xf32>
    %cst_16 = arith.constant 1.000000e+00 : f32
    %31 = vector.broadcast %cst_16 : f32 to vector<16x32xf32>
    %32 = arith.addf %31, %30 : vector<16x32xf32>
    %33 = arith.divf %31, %32 : vector<16x32xf32>
    %34 = arith.mulf %23, %33 : vector<16x32xf32>
    %c8 = arith.constant 8 : index
    %c0_17 = arith.constant 0 : index
    %35 = vector.load %arg13[%c8, %c0_17] : memref<32x32xf32, #tpu.memory_space<vmem>>, vector<16x32xf32>
    tpu.vector_store %arg13[%c8, %c0_17], %34 {strides = array<i32>} : memref<32x32xf32, #tpu.memory_space<vmem>>, vector<16x32xf32>,
    %c0_18 = arith.constant 0 : index
    %c0_19 = arith.constant 0 : index
    %c0_20 = arith.constant 0 : index
    %36 = vector.load %arg3[%c0_18, %c0_19, %c0_20] : memref<1x6x32xf32, #tpu.memory_space<vmem>>, vector<1x6x32xf32>
    %37 = vector.shape_cast %36 : vector<1x6x32xf32> to vector<6x32xf32>
    %cst_21 = arith.constant dense<0.000000e+00> : vector<6xf32>
    %38 = vector.multi_reduction <add>, %37, %cst_21 [1] : vector<6x32xf32> to vector<6xf32>
    %39 = vector.shape_cast %38 : vector<6xf32> to vector<6x1xf32>
    %cst_22 = arith.constant 3.200000e+01 : f32
    %40 = vector.broadcast %cst_22 : f32 to vector<6x1xf32>
    %41 = arith.divf %39, %40 : vector<6x1xf32>
    %42 = vector.broadcast %41 : vector<6x1xf32> to vector<6x32xf32>
    %43 = arith.subf %37, %42 : vector<6x32xf32>
    %44 = arith.mulf %43, %43 : vector<6x32xf32>
    %cst_23 = arith.constant dense<0.000000e+00> : vector<6xf32>
    %45 = vector.multi_reduction <add>, %44, %cst_23 [1] : vector<6x32xf32> to vector<6xf32>
    %46 = vector.shape_cast %45 : vector<6xf32> to vector<6x1xf32>
    %cst_24 = arith.constant 3.200000e+01 : f32
    %47 = vector.broadcast %cst_24 : f32 to vector<6x1xf32>
    %48 = arith.divf %46, %47 : vector<6x1xf32>
    %cst_25 = arith.constant 9.99999974E-6 : f32
    %49 = vector.broadcast %cst_25 : f32 to vector<6x1xf32>
    %50 = arith.addf %48, %49 : vector<6x1xf32>
    %51 = math.rsqrt %50 : vector<6x1xf32>
    %52 = vector.broadcast %51 : vector<6x1xf32> to vector<6x32xf32>
    %53 = arith.mulf %43, %52 : vector<6x32xf32>
    %54 = arith.truncf %53 : vector<6x32xf32> to vector<6x32xbf16>
    %c0_26 = arith.constant 0 : index
    %c0_27 = arith.constant 0 : index
    %55 = vector.load %arg4[%c0_26, %c0_27] : memref<32x32xbf16, #tpu.memory_space<vmem>>, vector<32x32xbf16>
    %cst_28 = arith.constant dense<0.000000e+00> : vector<6x32xf32>
    %56 = tpu.matmul %54, %55, %cst_28 {dimension_numbers = #tpu.dot_dimension_numbers<[1], [0], [0], [1], [0, 0, 1, 1], [], []>} : vector<6x32xbf16>, vector<32x32xbf16>, vector<6x32xf32> -> vector<6x32xf32>
    %c0_29 = arith.constant 0 : index
    %c0_30 = arith.constant 0 : index
    %57 = vector.load %arg6[%c0_29, %c0_30] : memref<1x32xf32, #tpu.memory_space<vmem>>, vector<1x32xf32>
    %58 = vector.broadcast %57 : vector<1x32xf32> to vector<6x32xf32>
    %59 = arith.addf %56, %58 : vector<6x32xf32>
    %c0_31 = arith.constant 0 : index
    %c0_32 = arith.constant 0 : index
    %60 = vector.load %arg5[%c0_31, %c0_32] : memref<32x32xbf16, #tpu.memory_space<vmem>>, vector<32x32xbf16>
    %cst_33 = arith.constant dense<0.000000e+00> : vector<6x32xf32>
    %61 = tpu.matmul %54, %60, %cst_33 {dimension_numbers = #tpu.dot_dimension_numbers<[1], [0], [0], [1], [0, 0, 1, 1], [], []>} : vector<6x32xbf16>, vector<32x32xbf16>, vector<6x32xf32> -> vector<6x32xf32>
    %c0_34 = arith.constant 0 : index
    %c0_35 = arith.constant 0 : index
    %62 = vector.load %arg7[%c0_34, %c0_35] : memref<1x32xf32, #tpu.memory_space<vmem>>, vector<1x32xf32>
    %63 = vector.broadcast %62 : vector<1x32xf32> to vector<6x32xf32>
    %64 = arith.addf %61, %63 : vector<6x32xf32>
    %65 = arith.negf %64 : vector<6x32xf32>
    %66 = math.exp %65 : vector<6x32xf32>
    %cst_36 = arith.constant 1.000000e+00 : f32
    %67 = vector.broadcast %cst_36 : f32 to vector<6x32xf32>
    %68 = arith.addf %67, %66 : vector<6x32xf32>
    %69 = arith.divf %67, %68 : vector<6x32xf32>
    %70 = arith.mulf %59, %69 : vector<6x32xf32>
    %c0_i32 = arith.constant 0 : i32
    %71 = arith.cmpi sgt, %arg1, %c0_i32 : i32
    %cst_37 = arith.constant 1.000000e+00 : f32
    %cst_38 = arith.constant 0.000000e+00 : f32
    %72 = arith.select %71, %cst_37, %cst_38 : f32
    %c0_i32_39 = arith.constant 0 : i32
    %73 = arith.cmpi slt, %arg1, %c0_i32_39 : i32
    %cst_40 = arith.constant 1.000000e+00 : f32
    %cst_41 = arith.constant 0.000000e+00 : f32
    %74 = arith.select %73, %cst_40, %cst_41 : f32
    %75 = vector.extract_strided_slice %70 {offsets = [0, 0], sizes = [3, 32], strides = [1, 1]} : vector<6x32xf32> to vector<3x32xf32>
    %76 = vector.broadcast %72 : f32 to vector<3x32xf32>
    %77 = arith.mulf %75, %76 : vector<3x32xf32>
    %c5 = arith.constant 5 : index
    %c0_42 = arith.constant 0 : index
    %78 = vector.load %arg13[%c5, %c0_42] : memref<32x32xf32, #tpu.memory_space<vmem>>, vector<3x32xf32>
    tpu.vector_store %arg13[%c5, %c0_42], %77 {strides = array<i32>} : memref<32x32xf32, #tpu.memory_space<vmem>>, vector<3x32xf32>,
    %79 = vector.extract_strided_slice %70 {offsets = [3, 0], sizes = [3, 32], strides = [1, 1]} : vector<6x32xf32> to vector<3x32xf32>
    %80 = vector.broadcast %74 : f32 to vector<3x32xf32>
    %81 = arith.mulf %79, %80 : vector<3x32xf32>
    %c24 = arith.constant 24 : index
    %c0_43 = arith.constant 0 : index
    %82 = vector.load %arg13[%c24, %c0_43] : memref<32x32xf32, #tpu.memory_space<vmem>>, vector<3x32xf32>
    tpu.vector_store %arg13[%c24, %c0_43], %81 {strides = array<i32>} : memref<32x32xf32, #tpu.memory_space<vmem>>, vector<3x32xf32>,
    %c0_44 = arith.constant 0 : index
    %c0_45 = arith.constant 0 : index
    %83 = vector.load %arg8[%c0_44, %c0_45] : memref<7x32xf32, #tpu.memory_space<vmem>>, vector<7x32xf32>
    %c5_46 = arith.constant 5 : index
    %c0_47 = arith.constant 0 : index
    %84 = vector.load %arg13[%c5_46, %c0_47] : memref<32x32xf32, #tpu.memory_space<vmem>>, vector<16x32xf32>
    %85 = vector.extract_strided_slice %83 {offsets = [0, 0], sizes = [1, 32], strides = [1, 1]} : vector<7x32xf32> to vector<1x32xf32>
    %86 = vector.broadcast %85 : vector<1x32xf32> to vector<16x32xf32>
    %87 = arith.mulf %84, %86 : vector<16x32xf32>
    %c6 = arith.constant 6 : index
    %c0_48 = arith.constant 0 : index
    %88 = vector.load %arg13[%c6, %c0_48] : memref<32x32xf32, #tpu.memory_space<vmem>>, vector<16x32xf32>
    %89 = vector.extract_strided_slice %83 {offsets = [1, 0], sizes = [1, 32], strides = [1, 1]} : vector<7x32xf32> to vector<1x32xf32>
    %90 = vector.broadcast %89 : vector<1x32xf32> to vector<16x32xf32>
    %91 = arith.mulf %88, %90 : vector<16x32xf32>
    %92 = arith.addf %87, %91 : vector<16x32xf32>
    %c7 = arith.constant 7 : index
    %c0_49 = arith.constant 0 : index
    %93 = vector.load %arg13[%c7, %c0_49] : memref<32x32xf32, #tpu.memory_space<vmem>>, vector<16x32xf32>
    %94 = vector.extract_strided_slice %83 {offsets = [2, 0], sizes = [1, 32], strides = [1, 1]} : vector<7x32xf32> to vector<1x32xf32>
    %95 = vector.broadcast %94 : vector<1x32xf32> to vector<16x32xf32>
    %96 = arith.mulf %93, %95 : vector<16x32xf32>
    %97 = arith.addf %92, %96 : vector<16x32xf32>
    %c8_50 = arith.constant 8 : index
    %c0_51 = arith.constant 0 : index
    %98 = vector.load %arg13[%c8_50, %c0_51] : memref<32x32xf32, #tpu.memory_space<vmem>>, vector<16x32xf32>
    %99 = vector.extract_strided_slice %83 {offsets = [3, 0], sizes = [1, 32], strides = [1, 1]} : vector<7x32xf32> to vector<1x32xf32>
    %100 = vector.broadcast %99 : vector<1x32xf32> to vector<16x32xf32>
    %101 = arith.mulf %98, %100 : vector<16x32xf32>
    %102 = arith.addf %97, %101 : vector<16x32xf32>
    %c9 = arith.constant 9 : index
    %c0_52 = arith.constant 0 : index
    %103 = vector.load %arg13[%c9, %c0_52] : memref<32x32xf32, #tpu.memory_space<vmem>>, vector<16x32xf32>
    %104 = vector.extract_strided_slice %83 {offsets = [4, 0], sizes = [1, 32], strides = [1, 1]} : vector<7x32xf32> to vector<1x32xf32>
    %105 = vector.broadcast %104 : vector<1x32xf32> to vector<16x32xf32>
    %106 = arith.mulf %103, %105 : vector<16x32xf32>
    %107 = arith.addf %102, %106 : vector<16x32xf32>
    %c10 = arith.constant 10 : index
    %c0_53 = arith.constant 0 : index
    %108 = vector.load %arg13[%c10, %c0_53] : memref<32x32xf32, #tpu.memory_space<vmem>>, vector<16x32xf32>
    %109 = vector.extract_strided_slice %83 {offsets = [5, 0], sizes = [1, 32], strides = [1, 1]} : vector<7x32xf32> to vector<1x32xf32>
    %110 = vector.broadcast %109 : vector<1x32xf32> to vector<16x32xf32>
    %111 = arith.mulf %108, %110 : vector<16x32xf32>
    %112 = arith.addf %107, %111 : vector<16x32xf32>
    %c11 = arith.constant 11 : index
    %c0_54 = arith.constant 0 : index
    %113 = vector.load %arg13[%c11, %c0_54] : memref<32x32xf32, #tpu.memory_space<vmem>>, vector<16x32xf32>
    %114 = vector.extract_strided_slice %83 {offsets = [6, 0], sizes = [1, 32], strides = [1, 1]} : vector<7x32xf32> to vector<1x32xf32>
    %115 = vector.broadcast %114 : vector<1x32xf32> to vector<16x32xf32>
    %116 = arith.mulf %113, %115 : vector<16x32xf32>
    %117 = arith.addf %112, %116 : vector<16x32xf32>
    %c0_55 = arith.constant 0 : index
    %c0_56 = arith.constant 0 : index
    %118 = vector.load %arg9[%c0_55, %c0_56] : memref<1x32xf32, #tpu.memory_space<vmem>>, vector<1x32xf32>
    %119 = vector.broadcast %118 : vector<1x32xf32> to vector<16x32xf32>
    %120 = arith.addf %117, %119 : vector<16x32xf32>
    %121 = arith.negf %120 : vector<16x32xf32>
    %122 = math.exp %121 : vector<16x32xf32>
    %cst_57 = arith.constant 1.000000e+00 : f32
    %123 = vector.broadcast %cst_57 : f32 to vector<16x32xf32>
    %124 = arith.addf %123, %122 : vector<16x32xf32>
    %125 = arith.divf %123, %124 : vector<16x32xf32>
    %126 = arith.mulf %120, %125 : vector<16x32xf32>
    %127 = arith.truncf %126 : vector<16x32xf32> to vector<16x32xbf16>
    %c0_58 = arith.constant 0 : index
    %c0_59 = arith.constant 0 : index
    %128 = vector.load %arg10[%c0_58, %c0_59] : memref<32x32xbf16, #tpu.memory_space<vmem>>, vector<32x32xbf16>
    %cst_60 = arith.constant dense<0.000000e+00> : vector<16x32xf32>
    %129 = tpu.matmul %127, %128, %cst_60 {dimension_numbers = #tpu.dot_dimension_numbers<[1], [0], [0], [1], [0, 0, 1, 1], [], []>} : vector<16x32xbf16>, vector<32x32xbf16>, vector<16x32xf32> -> vector<16x32xf32>
    %c0_61 = arith.constant 0 : index
    %c0_62 = arith.constant 0 : index
    %130 = vector.load %arg11[%c0_61, %c0_62] : memref<1x32xf32, #tpu.memory_space<vmem>>, vector<1x32xf32>
    %131 = vector.broadcast %130 : vector<1x32xf32> to vector<16x32xf32>
    %132 = arith.addf %129, %131 : vector<16x32xf32>
    %133 = arith.addf %132, %1 : vector<16x32xf32>
    %c0_63 = arith.constant 0 : index
    %c0_64 = arith.constant 0 : index
    %c0_65 = arith.constant 0 : index
    %134 = vector.load %arg12[%c0_63, %c0_64, %c0_65] : memref<1x16x32xf32, #tpu.memory_space<vmem>>, vector<1x16x32xf32>
    %135 = vector.shape_cast %134 : vector<1x16x32xf32> to vector<16x32xf32>
    %136 = vector.shape_cast %133 : vector<16x32xf32> to vector<1x16x32xf32>
    tpu.vector_store %arg12[%c0_63, %c0_64, %c0_65], %136 {strides = array<i32>} : memref<1x16x32xf32, #tpu.memory_space<vmem>>, vector<1x16x32xf32>,
    return
  }
  func.func @transform_0(%arg0: i32, %arg1: i32) -> (i32, i32, i32) {
    %c0_i32 = arith.constant 0 : i32
    %c0_i32_0 = arith.constant 0 : i32
    return %arg0, %arg1, %c0_i32 : i32, i32, i32
  }
  func.func @transform_1(%arg0: i32, %arg1: i32) -> (i32, i32, i32) {
    %c1_i32 = arith.constant 1 : i32
    %0 = arith.muli %arg0, %c1_i32 : i32
    %1 = arith.addi %0, %arg1 : i32
    %c0_i32 = arith.constant 0 : i32
    %c0_i32_0 = arith.constant 0 : i32
    %c0_i32_1 = arith.constant 0 : i32
    return %1, %c0_i32, %c0_i32_0 : i32, i32, i32
  }
  func.func @transform_2(%arg0: i32, %arg1: i32) -> (i32, i32) {
    %c0_i32 = arith.constant 0 : i32
    %c0_i32_0 = arith.constant 0 : i32
    %c0_i32_1 = arith.constant 0 : i32
    return %c0_i32, %c0_i32_0 : i32, i32
  }
  func.func @transform_3(%arg0: i32, %arg1: i32) -> (i32, i32) {
    %c0_i32 = arith.constant 0 : i32
    %c0_i32_0 = arith.constant 0 : i32
    %c0_i32_1 = arith.constant 0 : i32
    return %c0_i32, %c0_i32_0 : i32, i32
  }
  func.func @transform_4(%arg0: i32, %arg1: i32) -> (i32, i32) {
    %c0_i32 = arith.constant 0 : i32
    %c0_i32_0 = arith.constant 0 : i32
    %c0_i32_1 = arith.constant 0 : i32
    return %c0_i32, %c0_i32_0 : i32, i32
  }
  func.func @transform_5(%arg0: i32, %arg1: i32) -> (i32, i32) {
    %c0_i32 = arith.constant 0 : i32
    %c0_i32_0 = arith.constant 0 : i32
    %c0_i32_1 = arith.constant 0 : i32
    return %c0_i32, %c0_i32_0 : i32, i32
  }
  func.func @transform_6(%arg0: i32, %arg1: i32) -> (i32, i32) {
    %c0_i32 = arith.constant 0 : i32
    %c0_i32_0 = arith.constant 0 : i32
    %c0_i32_1 = arith.constant 0 : i32
    return %c0_i32, %c0_i32_0 : i32, i32
  }
  func.func @transform_7(%arg0: i32, %arg1: i32) -> (i32, i32) {
    %c0_i32 = arith.constant 0 : i32
    %c0_i32_0 = arith.constant 0 : i32
    %c0_i32_1 = arith.constant 0 : i32
    return %c0_i32, %c0_i32_0 : i32, i32
  }
  func.func @transform_8(%arg0: i32, %arg1: i32) -> (i32, i32) {
    %c0_i32 = arith.constant 0 : i32
    %c0_i32_0 = arith.constant 0 : i32
    %c0_i32_1 = arith.constant 0 : i32
    return %c0_i32, %c0_i32_0 : i32, i32
  }
  func.func @transform_9(%arg0: i32, %arg1: i32) -> (i32, i32) {
    %c0_i32 = arith.constant 0 : i32
    %c0_i32_0 = arith.constant 0 : i32
    %c0_i32_1 = arith.constant 0 : i32
    return %c0_i32, %c0_i32_0 : i32, i32
  }
  func.func @transform_10(%arg0: i32, %arg1: i32) -> (i32, i32, i32) {
    %c0_i32 = arith.constant 0 : i32
    %c0_i32_0 = arith.constant 0 : i32
    return %arg0, %arg1, %c0_i32 : i32, i32, i32
  }
}

</mosaic_0001>

<llo_original>
// kernel: tpu_custom_call.1
$region0: #{tpu_custom_call.1}
  #allocation0 [shape = 'u32[]', space=smem, size = 0x4, offset = 0x4, fixed_abs, tag = 'smem constant byte address 0x4 - core index']
  #allocation1 [shape = 'u32[72,128]{1,0:T(1,128)}', space=vmem, size = 0x9000, scoped, tag = 'internal scratch']
  #allocation2 [shape = 'f32[32,32]{1,0:T(8,128)}', space=vmem, size = 0x4000, scoped, tag = 'scratch operand']
  %s0 = inlined_call_operand.hbm [shape: f32[2,16,32], index: 0, kind: input, shape index: {}]
  %s1 = inlined_call_operand.vmem [shape: f32[2,6,32], index: 1, kind: input, shape index: {}]
  %s2 = inlined_call_operand.vmem [shape: bf16[32,32], index: 2, kind: input, shape index: {}]
  %s3 = inlined_call_operand.hbm [shape: bf16[32,32], index: 3, kind: input, shape index: {}]
  %s4 = inlined_call_operand.hbm [shape: f32[1,32], index: 4, kind: input, shape index: {}]
  %s5 = inlined_call_operand.hbm [shape: f32[1,32], index: 5, kind: input, shape index: {}]
  %s6 = inlined_call_operand.hbm [shape: f32[7,32], index: 6, kind: input, shape index: {}]
  %s7 = inlined_call_operand.vmem [shape: f32[1,32], index: 7, kind: input, shape index: {}]
  %s8 = inlined_call_operand.vmem [shape: bf16[32,32], index: 8, kind: input, shape index: {}]
  %s9 = inlined_call_operand.vmem [shape: f32[1,32], index: 9, kind: input, shape index: {}]
  %s10 = inlined_call_operand.hbm [shape: f32[2,16,32], index: 10, kind: output, shape index: {}]
  %s11 = sld [smem:[#allocation0]]
  $region93: #{tpu_custom_call.1} parent=0
    _
  %s13 = ssub.s32 1, %s11
  %s14 = scalar_select 0, %s13, %s11
  $region1: #{tpu_custom_call.1} parent=0
    #allocation3 [shape = 'u8[16384]{0}', space=vmem, size = 0x4000, scoped, tag = 'input window, operand 0']
    #allocation4 [shape = 's32[2]{0}', space=sflag, size = 0x8, scoped, tag = 'scoped memory for tpu_custom_call.1']
    #allocation5 [shape = 's32[2]{0}', space=sflag, size = 0x8, scoped, tag = 'scoped memory for tpu_custom_call.1']
    #allocation6 [shape = 'u8[8192]{0}', space=vmem, size = 0x2000, scoped, tag = 'input window, operand 3, single buffered']
    #allocation7 [shape = 's32[1]{0}', space=sflag, size = 0x4, scoped, tag = 'scoped memory for tpu_custom_call.1']
    #allocation8 [shape = 'u8[512]{0}', space=vmem, size = 0x400, scoped, tag = 'input window, operand 4, single buffered']
    #allocation9 [shape = 'u8[512]{0}', space=vmem, size = 0x400, scoped, tag = 'input window, operand 5, single buffered']
    #allocation10 [shape = 's32[1]{0}', space=sflag, size = 0x4, scoped, tag = 'scoped memory for tpu_custom_call.1']
    #allocation11 [shape = 'u8[4096]{0}', space=vmem, size = 0x1000, scoped, tag = 'input window, operand 6, single buffered']
    #allocation12 [shape = 'u8[16384]{0}', space=vmem, size = 0x4000, scoped, tag = 'output window, operand 0']
    %15 = vsyncpa [#allocation4], 0
    %s16 = scalar_lea.sflag [#allocation4], 1
    %17 = vsyncpa %s16, 0
    %18 = vsyncpa [#allocation7], 0
    %19 = vsyncpa [#allocation10], 0
    %20 = vsyncpa [#allocation5], 0
    %s21 = scalar_lea.sflag [#allocation5], 1
    %22 = vsyncpa %s21, 0
    loop: start=0, step=1, limit=4
    $region2: #{tpu_custom_call.1} parent=1 // loop_pre_header
      _
    $region3: #{tpu_custom_call.1} parent=1 // loop_header
      %s24 = sphi 0, %s28
      %p25 = scmp.ge.s32.totalorder %s24, 4
      %s31 = sphi 0, %s43
      %s32 = sphi 0, %s39
      %s33 = sphi 0, %s31
      %s34 = sphi 0, %s32
      %s35 = sphi 0, %s33
      %s36 = sphi 0, %s34
      %s48 = sphi 0, %s50
      %s51 = sphi 0, %s48
      %s52 = sphi 0, %s51
      %s68 = sphi 0, %s52
      %s76 = sphi 0, %s78
      %s79 = sphi 0, %s76
      %s80 = sphi 0, %s79
      %s96 = sphi 0, %s80
      %s100 = sphi 0, %s100
      %s102 = sphi 0, %s100
      %s103 = sphi 0, %s102
      %s117 = sphi 0, %s103
      %s121 = sphi 0, %s121
      %s123 = sphi 0, %s121
      %s124 = sphi 0, %s123
      %s138 = sphi 0, %s124
      %s142 = sphi 0, %s142
      %s144 = sphi 0, %s142
      %s145 = sphi 0, %s144
      %s159 = sphi 0, %s145
      %s163 = sphi 0, %s163
      %s165 = sphi 0, %s163
      %s166 = sphi 0, %s165
      %s180 = sphi 0, %s166
      %s184 = sphi 0, %s184
      %s186 = sphi 0, %s184
      %s187 = sphi 0, %s186
      %s201 = sphi 0, %s187
      %s205 = sphi 0, %s205
      %s207 = sphi 0, %s205
      %s208 = sphi 0, %s207
      %s222 = sphi 0, %s208
      %s226 = sphi 0, %s226
      %s228 = sphi 0, %s226
      %s229 = sphi 0, %s228
      %s243 = sphi 0, %s229
      %s247 = sphi 0, %s247
      %s249 = sphi 0, %s247
      %s250 = sphi 0, %s249
      %s264 = sphi 0, %s250
      %s272 = sphi 0, %s274
      %s275 = sphi 0, %s272
      %s276 = sphi 0, %s275
      %s292 = sphi 0, %s276
    $region4: #{tpu_custom_call.1} parent=1 // loop_header_branch
      %27 = sbr.rel (%p25) target = $region8
    $region5: #{tpu_custom_call.1} parent=1 // loop_body
      %s29 = ssub.s32 %s24, 1
      %s30 = ssub.s32 %s24, 2
      %s37 = sadd.s32 1, %s32
      %p38 = scmp.ge.s32.totalorder %s37, 1
      %s39 = scalar_select %p38, 0, %s37
      %s40 = sadd.s32 1, %s31
      %s41 = scalar_select %p38, %s40, %s31
      %p42 = scmp.ge.s32.totalorder %s41, 2
      %s43 = scalar_select %p42, 0, %s41
      %s44 = ssub.s32 %s31, %s43
      %s45 = ssub.s32 %s32, %s39
      %s46 = sor.u32 %s44, %s45
      %p47 = scmp.eq.s32.totalorder %s46, 0
      %s49 = sadd.s32 %s48, 1
      %s50 = scalar_select %p47, %s48, %s49
      %p53 = pneg %p47
      %p54 = scmp.eq.s32.totalorder %s24, 1
      %p55 = por %p53, %p54
      %p56 = scmp.ne.s32.totalorder %s48, %s51
      %p57 = scmp.eq.s32.totalorder %s24, 0
      %p58 = por %p56, %p57
      %p59 = scmp.ne.s32.totalorder %s48, %s51
      %p60 = scmp.eq.s32.totalorder %s29, 1
      %p61 = por %p59, %p60
      %p62 = scmp.ne.s32.totalorder %s51, %s52
      %p63 = scmp.eq.s32.totalorder %s29, 0
      %p64 = por %p62, %p63
      %p65 = scmp.ne.s32.totalorder %s51, %s52
      %p66 = scmp.eq.s32.totalorder %s30, 1
      %p67 = por %p65, %p66
      %p69 = scmp.ne.s32.totalorder %s52, %s68
      %p70 = scmp.eq.s32.totalorder %s30, 0
      %p71 = por %p69, %p70
      %s72 = sadd.s32 %s31, %s32
      %s73 = sadd.s32 %s43, %s39
      %s74 = ssub.s32 %s72, %s73
      %p75 = scmp.eq.s32.totalorder %s74, 0
      %s77 = sadd.s32 %s76, 1
      %s78 = scalar_select %p75, %s76, %s77
      %p81 = pneg %p75
      %p82 = scmp.eq.s32.totalorder %s24, 1
      %p83 = por %p81, %p82
      %p84 = scmp.ne.s32.totalorder %s76, %s79
      %p85 = scmp.eq.s32.totalorder %s24, 0
      %p86 = por %p84, %p85
      %p87 = scmp.ne.s32.totalorder %s76, %s79
      %p88 = scmp.eq.s32.totalorder %s29, 1
      %p89 = por %p87, %p88
      %p90 = scmp.ne.s32.totalorder %s79, %s80
      %p91 = scmp.eq.s32.totalorder %s29, 0
      %p92 = por %p90, %p91
      %p93 = scmp.ne.s32.totalorder %s79, %s80
      %p94 = scmp.eq.s32.totalorder %s30, 1
      %p95 = por %p93, %p94
      %p97 = scmp.ne.s32.totalorder %s80, %s96
      %p98 = scmp.eq.s32.totalorder %s30, 0
      %p99 = por %p97, %p98
      %s101 = sadd.s32 %s100, 1
      %p104 = scmp.eq.s32.totalorder %s24, 1
      %p105 = scmp.ne.s32.totalorder %s100, %s102
      %p106 = scmp.eq.s32.totalorder %s24, 0
      %p107 = por %p105, %p106
      %p108 = scmp.ne.s32.totalorder %s100, %s102
      %p109 = scmp.eq.s32.totalorder %s29, 1
      %p110 = por %p108, %p109
      %p111 = scmp.ne.s32.totalorder %s102, %s103
      %p112 = scmp.eq.s32.totalorder %s29, 0
      %p113 = por %p111, %p112
      %p114 = scmp.ne.s32.totalorder %s102, %s103
      %p115 = scmp.eq.s32.totalorder %s30, 1
      %p116 = por %p114, %p115
      %p118 = scmp.ne.s32.totalorder %s103, %s117
      %p119 = scmp.eq.s32.totalorder %s30, 0
      %p120 = por %p118, %p119
      %s122 = sadd.s32 %s121, 1
      %p125 = scmp.eq.s32.totalorder %s24, 1
      %p126 = scmp.ne.s32.totalorder %s121, %s123
      %p127 = scmp.eq.s32.totalorder %s24, 0
      %p128 = por %p126, %p127
      %p129 = scmp.ne.s32.totalorder %s121, %s123
      %p130 = scmp.eq.s32.totalorder %s29, 1
      %p131 = por %p129, %p130
      %p132 = scmp.ne.s32.totalorder %s123, %s124
      %p133 = scmp.eq.s32.totalorder %s29, 0
      %p134 = por %p132, %p133
      %p135 = scmp.ne.s32.totalorder %s123, %s124
      %p136 = scmp.eq.s32.totalorder %s30, 1
      %p137 = por %p135, %p136
      %p139 = scmp.ne.s32.totalorder %s124, %s138
      %p140 = scmp.eq.s32.totalorder %s30, 0
      %p141 = por %p139, %p140
      %s143 = sadd.s32 %s142, 1
      %p146 = scmp.eq.s32.totalorder %s24, 1
      %p147 = scmp.ne.s32.totalorder %s142, %s144
      %p148 = scmp.eq.s32.totalorder %s24, 0
      %p149 = por %p147, %p148
      %p150 = scmp.ne.s32.totalorder %s142, %s144
      %p151 = scmp.eq.s32.totalorder %s29, 1
      %p152 = por %p150, %p151
      %p153 = scmp.ne.s32.totalorder %s144, %s145
      %p154 = scmp.eq.s32.totalorder %s29, 0
      %p155 = por %p153, %p154
      %p156 = scmp.ne.s32.totalorder %s144, %s145
      %p157 = scmp.eq.s32.totalorder %s30, 1
      %p158 = por %p156, %p157
      %p160 = scmp.ne.s32.totalorder %s145, %s159
      %p161 = scmp.eq.s32.totalorder %s30, 0
      %p162 = por %p160, %p161
      %s164 = sadd.s32 %s163, 1
      %p167 = scmp.eq.s32.totalorder %s24, 1
      %p168 = scmp.ne.s32.totalorder %s163, %s165
      %p169 = scmp.eq.s32.totalorder %s24, 0
      %p170 = por %p168, %p169
      %p171 = scmp.ne.s32.totalorder %s163, %s165
      %p172 = scmp.eq.s32.totalorder %s29, 1
      %p173 = por %p171, %p172
      %p174 = scmp.ne.s32.totalorder %s165, %s166
      %p175 = scmp.eq.s32.totalorder %s29, 0
      %p176 = por %p174, %p175
      %p177 = scmp.ne.s32.totalorder %s165, %s166
      %p178 = scmp.eq.s32.totalorder %s30, 1
      %p179 = por %p177, %p178
      %p181 = scmp.ne.s32.totalorder %s166, %s180
      %p182 = scmp.eq.s32.totalorder %s30, 0
      %p183 = por %p181, %p182
      %s185 = sadd.s32 %s184, 1
      %p188 = scmp.eq.s32.totalorder %s24, 1
      %p189 = scmp.ne.s32.totalorder %s184, %s186
      %p190 = scmp.eq.s32.totalorder %s24, 0
      %p191 = por %p189, %p190
      %p192 = scmp.ne.s32.totalorder %s184, %s186
      %p193 = scmp.eq.s32.totalorder %s29, 1
      %p194 = por %p192, %p193
      %p195 = scmp.ne.s32.totalorder %s186, %s187
      %p196 = scmp.eq.s32.totalorder %s29, 0
      %p197 = por %p195, %p196
      %p198 = scmp.ne.s32.totalorder %s186, %s187
      %p199 = scmp.eq.s32.totalorder %s30, 1
      %p200 = por %p198, %p199
      %p202 = scmp.ne.s32.totalorder %s187, %s201
      %p203 = scmp.eq.s32.totalorder %s30, 0
      %p204 = por %p202, %p203
      %s206 = sadd.s32 %s205, 1
      %p209 = scmp.eq.s32.totalorder %s24, 1
      %p210 = scmp.ne.s32.totalorder %s205, %s207
      %p211 = scmp.eq.s32.totalorder %s24, 0
      %p212 = por %p210, %p211
      %p213 = scmp.ne.s32.totalorder %s205, %s207
      %p214 = scmp.eq.s32.totalorder %s29, 1
      %p215 = por %p213, %p214
      %p216 = scmp.ne.s32.totalorder %s207, %s208
      %p217 = scmp.eq.s32.totalorder %s29, 0
      %p218 = por %p216, %p217
      %p219 = scmp.ne.s32.totalorder %s207, %s208
      %p220 = scmp.eq.s32.totalorder %s30, 1
      %p221 = por %p219, %p220
      %p223 = scmp.ne.s32.totalorder %s208, %s222
      %p224 = scmp.eq.s32.totalorder %s30, 0
      %p225 = por %p223, %p224
      %s227 = sadd.s32 %s226, 1
      %p230 = scmp.eq.s32.totalorder %s24, 1
      %p231 = scmp.ne.s32.totalorder %s226, %s228
      %p232 = scmp.eq.s32.totalorder %s24, 0
      %p233 = por %p231, %p232
      %p234 = scmp.ne.s32.totalorder %s226, %s228
      %p235 = scmp.eq.s32.totalorder %s29, 1
      %p236 = por %p234, %p235
      %p237 = scmp.ne.s32.totalorder %s228, %s229
      %p238 = scmp.eq.s32.totalorder %s29, 0
      %p239 = por %p237, %p238
      %p240 = scmp.ne.s32.totalorder %s228, %s229
      %p241 = scmp.eq.s32.totalorder %s30, 1
      %p242 = por %p240, %p241
      %p244 = scmp.ne.s32.totalorder %s229, %s243
      %p245 = scmp.eq.s32.totalorder %s30, 0
      %p246 = por %p244, %p245
      %s248 = sadd.s32 %s247, 1
      %p251 = scmp.eq.s32.totalorder %s24, 1
      %p252 = scmp.ne.s32.totalorder %s247, %s249
      %p253 = scmp.eq.s32.totalorder %s24, 0
      %p254 = por %p252, %p253
      %p255 = scmp.ne.s32.totalorder %s247, %s249
      %p256 = scmp.eq.s32.totalorder %s29, 1
      %p257 = por %p255, %p256
      %p258 = scmp.ne.s32.totalorder %s249, %s250
      %p259 = scmp.eq.s32.totalorder %s29, 0
      %p260 = por %p258, %p259
      %p261 = scmp.ne.s32.totalorder %s249, %s250
      %p262 = scmp.eq.s32.totalorder %s30, 1
      %p263 = por %p261, %p262
      %p265 = scmp.ne.s32.totalorder %s250, %s264
      %p266 = scmp.eq.s32.totalorder %s30, 0
      %p267 = por %p265, %p266
      %s268 = ssub.s32 %s31, %s43
      %s269 = ssub.s32 %s32, %s39
      %s270 = sor.u32 %s268, %s269
      %p271 = scmp.eq.s32.totalorder %s270, 0
      %s273 = sadd.s32 %s272, 1
      %s274 = scalar_select %p271, %s272, %s273
      %p277 = pneg %p271
      %p278 = scmp.eq.s32.totalorder %s24, 1
      %p279 = por %p277, %p278
      %p280 = scmp.ne.s32.totalorder %s272, %s275
      %p281 = scmp.eq.s32.totalorder %s24, 0
      %p282 = por %p280, %p281
      %p283 = scmp.ne.s32.totalorder %s272, %s275
      %p284 = scmp.eq.s32.totalorder %s29, 1
      %p285 = por %p283, %p284
      %p286 = scmp.ne.s32.totalorder %s275, %s276
      %p287 = scmp.eq.s32.totalorder %s29, 0
      %p288 = por %p286, %p287
      %p289 = scmp.ne.s32.totalorder %s275, %s276
      %p290 = scmp.eq.s32.totalorder %s30, 1
      %p291 = por %p289, %p290
      %p293 = scmp.ne.s32.totalorder %s276, %s292
      %p294 = scmp.eq.s32.totalorder %s30, 0
      %p295 = por %p293, %p294
      %p296 = scmp.le.s32.totalorder 1, %s24
      %p297 = scmp.lt.s32.totalorder %s24, 3
      %p298 = pnand %p296, %p297
      %p299 = pneg %p298
      // Predicated region
      $region9: #{tpu_custom_call.1} parent=5 // pred_check
        _
      $region10: #{tpu_custom_call.1} parent=5 // pred_check_branch
        %301 = sbr.rel (%p298) target = $region12
      $region11: #{tpu_custom_call.1} parent=5 // pred_region
        %s302 = ssub.s32 %s24, 1
        // Predicated region
        $region13: #{tpu_custom_call.1} parent=11 // pred_check
          %p303 = pneg %p113
        $region14: #{tpu_custom_call.1} parent=11 // pred_check_branch
          %305 = sbr.rel (%p303) target = $region16
        $region15: #{tpu_custom_call.1} parent=11 // pred_region
          _
        $region16: #{tpu_custom_call.1} parent=11 // pred_fallthru
          _
        // Predicated region
        $region17: #{tpu_custom_call.1} parent=11 // pred_check
          %p306 = pneg %p134
        $region18: #{tpu_custom_call.1} parent=11 // pred_check_branch
          %308 = sbr.rel (%p306) target = $region20
        $region19: #{tpu_custom_call.1} parent=11 // pred_region
          %310 = vsyncadd [#allocation7], 0
          %s311 = sshll.u32 %s3, 4
          %s312 = int_to_ptr.hbm [resolvable:$true] %s311
          %s313 = sshll.u32 [#allocation6], 4
          %s314 = int_to_ptr.vmem [resolvable:$true] %s313
          %319 = dma.hbm_to_vmem [thread:$0]  %s312, 256, %s314, [#allocation7], 64, 64, 4
        $region20: #{tpu_custom_call.1} parent=11 // pred_fallthru
          _
        // Predicated region
        $region21: #{tpu_custom_call.1} parent=11 // pred_check
          %p320 = pneg %p155
        $region22: #{tpu_custom_call.1} parent=11 // pred_check_branch
          %322 = sbr.rel (%p320) target = $region24
        $region23: #{tpu_custom_call.1} parent=11 // pred_region
          %324 = vsyncadd [#allocation7], 0
          %s326 = sshll.u32 %s4, 4
          %s327 = int_to_ptr.hbm [resolvable:$true] %s326
          %s328 = sshll.u32 [#allocation8], 4
          %s329 = int_to_ptr.vmem [resolvable:$true] %s328
          %331 = dma.hbm_to_vmem [thread:$0]  %s327, 16, %s329, [#allocation7]
        $region24: #{tpu_custom_call.1} parent=11 // pred_fallthru
          _
        // Predicated region
        $region25: #{tpu_custom_call.1} parent=11 // pred_check
          %p332 = pneg %p176
        $region26: #{tpu_custom_call.1} parent=11 // pred_check_branch
          %334 = sbr.rel (%p332) target = $region28
        $region27: #{tpu_custom_call.1} parent=11 // pred_region
          %336 = vsyncadd [#allocation10], 0
          %s338 = sshll.u32 %s5, 4
          %s339 = int_to_ptr.hbm [resolvable:$true] %s338
          %s340 = sshll.u32 [#allocation9], 4
          %s341 = int_to_ptr.vmem [resolvable:$true] %s340
          %343 = dma.hbm_to_vmem [thread:$0]  %s339, 16, %s341, [#allocation10]
        $region28: #{tpu_custom_call.1} parent=11 // pred_fallthru
          _
        // Predicated region
        $region29: #{tpu_custom_call.1} parent=11 // pred_check
          %p344 = pneg %p197
        $region30: #{tpu_custom_call.1} parent=11 // pred_check_branch
          %346 = sbr.rel (%p344) target = $region32
        $region31: #{tpu_custom_call.1} parent=11 // pred_region
          %348 = vsyncadd [#allocation10], 0
          %s350 = sshll.u32 %s6, 4
          %s351 = int_to_ptr.hbm [resolvable:$true] %s350
          %s352 = sshll.u32 [#allocation11], 4
          %s353 = int_to_ptr.vmem [resolvable:$true] %s352
          %355 = dma.hbm_to_vmem [thread:$0]  %s351, 128, %s353, [#allocation10]
        $region32: #{tpu_custom_call.1} parent=11 // pred_fallthru
          _
        // Predicated region
        $region33: #{tpu_custom_call.1} parent=11 // pred_check
          %p356 = pneg %p218
        $region34: #{tpu_custom_call.1} parent=11 // pred_check_branch
          %358 = sbr.rel (%p356) target = $region36
        $region35: #{tpu_custom_call.1} parent=11 // pred_region
          _
        $region36: #{tpu_custom_call.1} parent=11 // pred_fallthru
          _
        // Predicated region
        $region37: #{tpu_custom_call.1} parent=11 // pred_check
          %p359 = pneg %p239
        $region38: #{tpu_custom_call.1} parent=11 // pred_check_branch
          %361 = sbr.rel (%p359) target = $region40
        $region39: #{tpu_custom_call.1} parent=11 // pred_region
          _
        $region40: #{tpu_custom_call.1} parent=11 // pred_fallthru
          _
        // Predicated region
        $region41: #{tpu_custom_call.1} parent=11 // pred_check
          %p362 = pneg %p260
        $region42: #{tpu_custom_call.1} parent=11 // pred_check_branch
          %364 = sbr.rel (%p362) target = $region44
        $region43: #{tpu_custom_call.1} parent=11 // pred_region
          _
        $region44: #{tpu_custom_call.1} parent=11 // pred_fallthru
          _
      $region12: #{tpu_custom_call.1} parent=5 // pred_fallthru
        _
      %p365 = scmp.lt.s32.totalorder %s24, 2
      // Predicated region
      $region45: #{tpu_custom_call.1} parent=5 // pred_check
        %p366 = pneg %p365
      $region46: #{tpu_custom_call.1} parent=5 // pred_check_branch
        %368 = sbr.rel (%p366) target = $region48
      $region47: #{tpu_custom_call.1} parent=5 // pred_region
        // Predicated region
        $region49: #{tpu_custom_call.1} parent=47 // pred_check
          %p369 = pneg %p58
        $region50: #{tpu_custom_call.1} parent=47 // pred_check_branch
          %371 = sbr.rel (%p369) target = $region52
        $region51: #{tpu_custom_call.1} parent=47 // pred_region
          %s372 = sand.u32 %s48, 1
          %s373 = scalar_lea.sflag [#allocation4], %s372
          %s374 = sand.u32 %s48, 1
          %s375 = smul.addr %s374, 16
          %s376 = scalar_lea.vmem [#allocation3], %s375
          %s377 = smul.u32 2, %s32
          %379 = vsyncadd %s373, 0
          %s380 = smul.addr %s31, 2
          %s381 = sadd.s32 %s377, %s380
          %s382 = smul.addr %s381, 8
          %s383 = scalar_lea.hbm %s0, %s382
          %s384 = sshll.u32 %s383, 4
          %s385 = int_to_ptr.hbm [resolvable:$true] %s384
          %s386 = sshll.u32 %s376, 4
          %s387 = int_to_ptr.vmem [resolvable:$true] %s386
          %392 = dma.hbm_to_vmem [thread:$0]  %s385, 256, %s387, %s373, 128, 128, 8
        $region52: #{tpu_custom_call.1} parent=47 // pred_fallthru
          _
        // Predicated region
        $region53: #{tpu_custom_call.1} parent=47 // pred_check
          %p393 = pneg %p86
        $region54: #{tpu_custom_call.1} parent=47 // pred_check_branch
          %395 = sbr.rel (%p393) target = $region56
        $region55: #{tpu_custom_call.1} parent=47 // pred_region
          %s396 = sadd.s32 %s31, %s32
          %p397 = scmp.lt.s32.totalorder %s396, 1
          %s398 = scalar_select %p397, %s396, 1
          %s399 = smul.addr %s398, 8
          %s400 = scalar_lea.vmem %s1, %s399
          %s401 = sadd.s32 %s31, %s32
        $region56: #{tpu_custom_call.1} parent=47 // pred_fallthru
          _
      $region48: #{tpu_custom_call.1} parent=5 // pred_fallthru
        _
      %p402 = scmp.le.s32.totalorder 1, %s24
      %p403 = scmp.lt.s32.totalorder %s24, 3
      %p404 = pnand %p402, %p403
      %p405 = pneg %p404
      // Predicated region
      $region57: #{tpu_custom_call.1} parent=5 // pred_check
        _
      $region58: #{tpu_custom_call.1} parent=5 // pred_check_branch
        %407 = sbr.rel (%p404) target = $region60
      $region59: #{tpu_custom_call.1} parent=5 // pred_region
        %s408 = ssub.s32 %s24, 1
        %s409 = sand.u32 %s51, 1
        %s410 = scalar_lea.sflag [#allocation4], %s409
        %s411 = sand.u32 %s51, 1
        %s412 = smul.addr %s411, 16
        %s413 = scalar_lea.vmem [#allocation3], %s412
        // Predicated region
        $region61: #{tpu_custom_call.1} parent=59 // pred_check
          %p414 = pneg %p64
        $region62: #{tpu_custom_call.1} parent=59 // pred_check_branch
          %416 = sbr.rel (%p414) target = $region64
        $region63: #{tpu_custom_call.1} parent=59 // pred_region
          %418 = dma.done %s410, 256
        $region64: #{tpu_custom_call.1} parent=59 // pred_fallthru
          _
        // Predicated region
        $region65: #{tpu_custom_call.1} parent=59 // pred_check
          %p419 = pneg %p134
        $region66: #{tpu_custom_call.1} parent=59 // pred_check_branch
          %421 = sbr.rel (%p419) target = $region68
        $region67: #{tpu_custom_call.1} parent=59 // pred_region
          %423 = dma.done [#allocation7], 256
        $region68: #{tpu_custom_call.1} parent=59 // pred_fallthru
          _
        // Predicated region
        $region69: #{tpu_custom_call.1} parent=59 // pred_check
          %p424 = pneg %p155
        $region70: #{tpu_custom_call.1} parent=59 // pred_check_branch
          %426 = sbr.rel (%p424) target = $region72
        $region71: #{tpu_custom_call.1} parent=59 // pred_region
          %428 = dma.done [#allocation7], 16
        $region72: #{tpu_custom_call.1} parent=59 // pred_fallthru
          _
        // Predicated region
        $region73: #{tpu_custom_call.1} parent=59 // pred_check
          %p429 = pneg %p176
        $region74: #{tpu_custom_call.1} parent=59 // pred_check_branch
          %431 = sbr.rel (%p429) target = $region76
        $region75: #{tpu_custom_call.1} parent=59 // pred_region
          %433 = dma.done [#allocation10], 16
        $region76: #{tpu_custom_call.1} parent=59 // pred_fallthru
          _
        // Predicated region
        $region77: #{tpu_custom_call.1} parent=59 // pred_check
          %p434 = pneg %p197
        $region78: #{tpu_custom_call.1} parent=59 // pred_check_branch
          %436 = sbr.rel (%p434) target = $region80
        $region79: #{tpu_custom_call.1} parent=59 // pred_region
          %438 = dma.done [#allocation10], 128
        $region80: #{tpu_custom_call.1} parent=59 // pred_fallthru
          _
        %s439 = sand.u32 %s51, 1
        %s440 = scalar_lea.sflag [#allocation4], %s439
        %s441 = sand.u32 %s51, 1
        %s442 = smul.addr %s441, 16
        %s443 = scalar_lea.vmem [#allocation3], %s442
        %p444 = pneg %p64
        %p445 = pneg %p61
        %s446 = sadd.s32 %s33, %s34
        %p447 = scmp.lt.s32.totalorder %s446, 1
        %s448 = scalar_select %p447, %s446, 1
        %s449 = smul.addr %s448, 8
        %s450 = scalar_lea.vmem %s1, %s449
        %p451 = pneg %p92
        %p452 = pneg %p89
        %p453 = pneg %p113
        %p454 = pneg %p110
        %p455 = pneg %p134
        %p456 = pneg %p131
        %p457 = pneg %p155
        %p458 = pneg %p152
        %p459 = pneg %p176
        %p460 = pneg %p173
        %p461 = pneg %p197
        %p462 = pneg %p194
        %p463 = pneg %p218
        %p464 = pneg %p215
        %p465 = pneg %p239
        %p466 = pneg %p236
        %p467 = pneg %p260
        %p468 = pneg %p257
        %p469 = pneg %p288
        %p470 = pneg %p285
        %s471 = sand.u32 %s275, 1
        %s472 = scalar_lea.sflag [#allocation5], %s471
        %s473 = sand.u32 %s275, 1
        %s474 = smul.addr %s473, 16
        %s475 = scalar_lea.vmem [#allocation12], %s474
        %s476 = smul.u32 2, %s34
        %s477 = sadd.s32 %s33, %s34
        %p478 = scmp.lt.s32.totalorder %s477, 1
        %s479 = scalar_select %p478, %s477, 1
        %s480 = smul.addr %s479, 8
        %s481 = scalar_lea.vmem %s1, %s480
        %s482 = sadd.s32 %s33, %s34
        %s483 = smul.u32 2, %s34
        %v485 = vld [vmem:[%s413] sm:$0xff]
        %v486 = vld [vmem:[%s413 + $0x8] sm:$0xff]
        %vm487 = vcmask 261120
        %v488 = vsel %vm487, %v485, 0.0
        %489 = vadd.xlane.f32.xlu0 %v488
        %v490 = vpop.xlane.xlu0 %489
        %v491 = vsel %vm487, %v486, 0.0
        %492 = vadd.xlane.f32.xlu0 %v491
        %v493 = vpop.xlane.xlu0 %492
        %v494 = vrcp.pop 32.0
        %v495 = vmul.f32 32.0, %v494
        %v496 = vsub.f32 1.0, %v495
        %v497 = vmul.f32 %v494, %v496
        %v498 = vadd.f32 %v494, %v497
        %vm499 = vweird.f32 %v494
        %v500 = vsel %vm499, %v494, %v498
        %v501 = vmul.f32 %v490, %v500
        %v502 = vmul.f32 %v493, %v500
        %v503 = vsub.f32 %v485, %v501
        %v504 = vsub.f32 %v486, %v502
        %v505 = vmul.f32 %v503, %v503
        %v506 = vmul.f32 %v504, %v504
        %v507 = vsel %vm487, %v505, 0.0
        %508 = vadd.xlane.f32.xlu0 %v507
        %v509 = vpop.xlane.xlu0 %508
        %v510 = vsel %vm487, %v506, 0.0
        %511 = vadd.xlane.f32.xlu0 %v510
        %v512 = vpop.xlane.xlu0 %511
        %v513 = vmul.f32 %v509, %v500
        %v514 = vmul.f32 %v512, %v500
        %v515 = vadd.f32 %v513, 1e-05
        %v516 = vadd.f32 %v514, 1e-05
        %v517 = vrsqrt.pop %v515
        %v518 = vmul.f32 %v517, %v515
        %v519 = vmul.f32 %v518, %v517
        %v520 = vmul.f32 0.5, %v519
        %v521 = vsub.f32 1.5, %v520
        %v522 = vmul.f32 %v517, %v521
        %vm523 = vweird.f32 %v515
        %vm524 = vweird.f32 %v517
        %vm525 = vmor %vm523, %vm524
        %v526 = vsel %vm525, %v517, %v522
        %v527 = vrsqrt.pop %v516
        %v528 = vmul.f32 %v527, %v516
        %v529 = vmul.f32 %v528, %v527
        %v530 = vmul.f32 0.5, %v529
        %v531 = vsub.f32 1.5, %v530
        %v532 = vmul.f32 %v527, %v531
        %vm533 = vweird.f32 %v516
        %vm534 = vweird.f32 %v527
        %vm535 = vmor %vm533, %vm534
        %v536 = vsel %vm535, %v527, %v532
        %v537 = vmul.f32 %v503, %v526
        %v538 = vmul.f32 %v504, %v536
        %v539 = vpack.c.bf16 %v538, %v537
        %v540 = vld [vmem:[%s2] sm:$0xf]
        %v541 = vld [vmem:[%s2 + $0x4] sm:$0xf]
        %v542 = vld [vmem:[%s2 + $0x8] sm:$0xf]
        %v543 = vld [vmem:[%s2 + $0xc] sm:$0xf]
        %v544 = vld [vmem:[#allocation8] sm:$0x1]
        %v546 = vperm.slane %v544, 0
        %v552 = vunpack.c.l.b16 %v540
        %v553 = vunpack.c.l.b16 %v541
        %v554 = vunpack.c.l.b16 %v542
        %v555 = vunpack.c.l.b16 %v543
        %v556 = vpack.c.b16 %v553, %v552
        %v557 = vpack.c.b16 %v555, %v554
        %v561 = vsel %vm487, %v539, 0
        %563 = vmatpush.bf16.msra.mxu0 0
        %564 = vmatpush.bf16.msra.mxu0 0
        %565 = vmatpush.bf16.msra.mxu0 0
        %566 = vmatpush.bf16.msra.mxu0 0
        %567 = vmatpush.bf16.msra.mxu0 0
        %568 = vmatpush.bf16.msra.mxu0 0
        %569 = vmatpush.bf16.msra.mxu0 %v557
        %570 = vmatpush.bf16.msra.mxu0 %v556
        %571 = vmatmul.bf16.gmra.mxu0 %v561
        %v572 = vpop.f32.mrf.mxu0
        %v573 = vadd.f32 %v546, %v572
        %v574 = vpop.f32.mrf.mxu0
        %v575 = vadd.f32 %v546, %v574
        %576 = vdwg.mxu0
        %v577 = vld [vmem:[#allocation6] sm:$0xf]
        %v578 = vld [vmem:[#allocation6 + $0x4] sm:$0xf]
        %v579 = vld [vmem:[#allocation6 + $0x8] sm:$0xf]
        %v580 = vld [vmem:[#allocation6 + $0xc] sm:$0xf]
        %v581 = vld [vmem:[#allocation9] sm:$0x1]
        %v583 = vperm.slane %v581, 0
        %v589 = vunpack.c.l.b16 %v577
        %v590 = vunpack.c.l.b16 %v578
        %v591 = vunpack.c.l.b16 %v579
        %v592 = vunpack.c.l.b16 %v580
        %v593 = vpack.c.b16 %v590, %v589
        %v594 = vpack.c.b16 %v592, %v591
        %597 = vmatpush.bf16.msra.mxu0 0
        %598 = vmatpush.bf16.msra.mxu0 0
        %599 = vmatpush.bf16.msra.mxu0 0
        %600 = vmatpush.bf16.msra.mxu0 0
        %601 = vmatpush.bf16.msra.mxu0 0
        %602 = vmatpush.bf16.msra.mxu0 0
        %603 = vmatpush.bf16.msra.mxu0 %v594
        %604 = vmatpush.bf16.msra.mxu0 %v593
        %605 = vmatmul.bf16.gmra.mxu0 %v561
        %v606 = vpop.f32.mrf.mxu0
        %v607 = vadd.f32 %v583, %v606
        %v608 = vpop.f32.mrf.mxu0
        %v609 = vadd.f32 %v583, %v608
        %610 = vdwg.mxu0
        %v611 = vxor.u32 %v607, 2147483648
        %v612 = vxor.u32 %v609, 2147483648
        %v613 = vmul.f32 %v611, 1.442695
        %v614 = vpow.pop %v613
        %v615 = vmul.f32 %v612, 1.442695
        %v616 = vpow.pop %v615
        %v617 = vadd.f32 %v614, 1.0
        %v618 = vadd.f32 %v616, 1.0
        %v619 = vrcp.pop %v617
        %v620 = vmul.f32 %v617, %v619
        %v621 = vsub.f32 1.0, %v620
        %v622 = vmul.f32 %v619, %v621
        %v623 = vadd.f32 %v619, %v622
        %vm624 = vweird.f32 %v617
        %vm625 = vweird.f32 %v619
        %vm626 = vmor %vm624, %vm625
        %v627 = vsel %vm626, %v619, %v623
        %v628 = vand.u32 2147483647, %v617
        %vm629 = vcmp.eq.f32.partialorder %v628, 8.507059e+37
        %v630 = vand.u32 %v617, 2147483648
        %v631 = vor.u32 1.1754944e-38, %v630
        %v632 = vsel %vm629, %v631, %v627
        %v633 = vmul.f32 1.0, %v632
        %v634 = vrcp.pop %v618
        %v635 = vmul.f32 %v618, %v634
        %v636 = vsub.f32 1.0, %v635
        %v637 = vmul.f32 %v634, %v636
        %v638 = vadd.f32 %v634, %v637
        %vm639 = vweird.f32 %v618
        %vm640 = vweird.f32 %v634
        %vm641 = vmor %vm639, %vm640
        %v642 = vsel %vm641, %v634, %v638
        %v643 = vand.u32 2147483647, %v618
        %vm644 = vcmp.eq.f32.partialorder %v643, 8.507059e+37
        %v645 = vand.u32 %v618, 2147483648
        %v646 = vor.u32 1.1754944e-38, %v645
        %v647 = vsel %vm644, %v646, %v642
        %v648 = vmul.f32 1.0, %v647
        %v649 = vmul.f32 %v573, %v633
        %v650 = vmul.f32 %v575, %v648
        %651 = vst.msk [vmem:[#allocation2 + $0x8] sm:$0xff] %vm487, %v649
        %652 = vst.msk [vmem:[#allocation2 + $0x10] sm:$0xff] %vm487, %v650
        %v653 = vld [vmem:[%s481] sm:$0x3f]
        %vm654 = vcmask 259072
        %v655 = vsel %vm654, %v653, 0.0
        %656 = vadd.xlane.f32.xlu0 %v655
        %v657 = vpop.xlane.xlu0 %656
        %v658 = vmul.f32 %v657, %v500
        %v659 = vsub.f32 %v653, %v658
        %v660 = vmul.f32 %v659, %v659
        %v661 = vsel %vm654, %v660, 0.0
        %662 = vadd.xlane.f32.xlu0 %v661
        %v663 = vpop.xlane.xlu0 %662
        %v664 = vmul.f32 %v663, %v500
        %v665 = vadd.f32 %v664, 1e-05
        %v666 = vrsqrt.pop %v665
        %v667 = vmul.f32 %v666, %v665
        %v668 = vmul.f32 %v667, %v666
        %v669 = vmul.f32 0.5, %v668
        %v670 = vsub.f32 1.5, %v669
        %v671 = vmul.f32 %v666, %v670
        %vm672 = vweird.f32 %v665
        %vm673 = vweird.f32 %v666
        %vm674 = vmor %vm672, %vm673
        %v675 = vsel %vm674, %v666, %v671
        %v676 = vmul.f32 %v659, %v675
        %v677 = vpack.c.bf16 %v676, %v676
        %v678 = vld [vmem:[%s2] sm:$0xf]
        %v679 = vld [vmem:[%s2 + $0x4] sm:$0xf]
        %v680 = vld [vmem:[%s2 + $0x8] sm:$0xf]
        %v681 = vld [vmem:[%s2 + $0xc] sm:$0xf]
        %v682 = vld [vmem:[#allocation8] sm:$0x1]
        %v684 = vperm.slane %v682, 0
        %v690 = vunpack.c.l.b16 %v678
        %v691 = vunpack.c.l.b16 %v679
        %v692 = vunpack.c.l.b16 %v680
        %v693 = vunpack.c.l.b16 %v681
        %v694 = vpack.c.b16 %v691, %v690
        %v695 = vpack.c.b16 %v693, %v692
        %v699 = vsel %vm487, %v677, 0
        %701 = vmatpush.bf16.msra.mxu0 0
        %702 = vmatpush.bf16.msra.mxu0 0
        %703 = vmatpush.bf16.msra.mxu0 0
        %704 = vmatpush.bf16.msra.mxu0 0
        %705 = vmatpush.bf16.msra.mxu0 0
        %706 = vmatpush.bf16.msra.mxu0 0
        %707 = vmatpush.bf16.msra.mxu0 %v695
        %708 = vmatpush.bf16.msra.mxu0 %v694
        %709 = vmatmul.bf16.gmra.mxu0 %v699
        %v710 = vpop.f32.mrf.mxu0
        %v711 = vadd.f32 %v684, %v710
        %v712 = vpop.f32.mrf.mxu0
        %713 = vdwg.mxu0
        %v714 = vld [vmem:[#allocation6] sm:$0xf]
        %v715 = vld [vmem:[#allocation6 + $0x4] sm:$0xf]
        %v716 = vld [vmem:[#allocation6 + $0x8] sm:$0xf]
        %v717 = vld [vmem:[#allocation6 + $0xc] sm:$0xf]
        %v718 = vld [vmem:[#allocation9] sm:$0x1]
        %v720 = vperm.slane %v718, 0
        %v726 = vunpack.c.l.b16 %v714
        %v727 = vunpack.c.l.b16 %v715
        %v728 = vunpack.c.l.b16 %v716
        %v729 = vunpack.c.l.b16 %v717
        %v730 = vpack.c.b16 %v727, %v726
        %v731 = vpack.c.b16 %v729, %v728
        %734 = vmatpush.bf16.msra.mxu0 0
        %735 = vmatpush.bf16.msra.mxu0 0
        %736 = vmatpush.bf16.msra.mxu0 0
        %737 = vmatpush.bf16.msra.mxu0 0
        %738 = vmatpush.bf16.msra.mxu0 0
        %739 = vmatpush.bf16.msra.mxu0 0
        %740 = vmatpush.bf16.msra.mxu0 %v731
        %741 = vmatpush.bf16.msra.mxu0 %v730
        %742 = vmatmul.bf16.gmra.mxu0 %v699
        %v743 = vpop.f32.mrf.mxu0
        %v744 = vadd.f32 %v720, %v743
        %v745 = vpop.f32.mrf.mxu0
        %746 = vdwg.mxu0
        %v747 = vxor.u32 %v744, 2147483648
        %v748 = vmul.f32 %v747, 1.442695
        %v749 = vpow.pop %v748
        %v750 = vadd.f32 %v749, 1.0
        %v751 = vrcp.pop %v750
        %v752 = vmul.f32 %v750, %v751
        %v753 = vsub.f32 1.0, %v752
        %v754 = vmul.f32 %v751, %v753
        %v755 = vadd.f32 %v751, %v754
        %vm756 = vweird.f32 %v750
        %vm757 = vweird.f32 %v751
        %vm758 = vmor %vm756, %vm757
        %v759 = vsel %vm758, %v751, %v755
        %v760 = vand.u32 2147483647, %v750
        %vm761 = vcmp.eq.f32.partialorder %v760, 8.507059e+37
        %v762 = vand.u32 %v750, 2147483648
        %v763 = vor.u32 1.1754944e-38, %v762
        %v764 = vsel %vm761, %v763, %v759
        %v765 = vmul.f32 1.0, %v764
        %v766 = vmul.f32 %v711, %v765
        %p767 = scmp.gt.s32.totalorder %s34, 0
        %s768 = scalar_select %p767, 1.0, 0.0
        %p769 = scmp.lt.s32.totalorder %s34, 0
        %s770 = scalar_select %p769, 1.0, 0.0
        %v771 = vstv %s768
        %v772 = vmul.f32 %v766, %v771
        %vm773 = vcmask 256000
        %774 = vst.msk [vmem:[#allocation2 + $0x5] sm:$0x7] %vm773, %v772
        %v775 = vstv %s770
        %v776 = vmul.f32 %v766, %v775
        %vm777 = vcmask 259075
        %778 = vst.msk [vmem:[#allocation2 + $0x15] sm:$0x38] %vm777, %v776
        %v779 = vld [vmem:[#allocation11] sm:$0x7f]
        %v780 = vld [vmem:[#allocation2 + $0x5] sm:$0xff]
        %v781 = vld [vmem:[#allocation2 + $0xd] sm:$0xff]
        %v782 = vperm.slane %v779, 0
        %v783 = vmul.f32 %v780, %v782
        %v784 = vmul.f32 %v781, %v782
        %v785 = vld [vmem:[#allocation2 + $0x6] sm:$0xff]
        %v786 = vld [vmem:[#allocation2 + $0xe] sm:$0xff]
        %v787 = vperm.slane %v779, 1
        %v788 = vmul.f32 %v785, %v787
        %v789 = vmul.f32 %v786, %v787
        %v790 = vadd.f32 %v783, %v788
        %v791 = vadd.f32 %v784, %v789
        %v792 = vld [vmem:[#allocation2 + $0x7] sm:$0xff]
        %v793 = vld [vmem:[#allocation2 + $0xf] sm:$0xff]
        %v794 = vperm.slane %v779, 2
        %v795 = vmul.f32 %v792, %v794
        %v796 = vmul.f32 %v793, %v794
        %v797 = vadd.f32 %v790, %v795
        %v798 = vadd.f32 %v791, %v796
        %v799 = vld [vmem:[#allocation2 + $0x8] sm:$0xff]
        %v800 = vld [vmem:[#allocation2 + $0x10] sm:$0xff]
        %v801 = vperm.slane %v779, 3
        %v802 = vmul.f32 %v799, %v801
        %v803 = vmul.f32 %v800, %v801
        %v804 = vadd.f32 %v797, %v802
        %v805 = vadd.f32 %v798, %v803
        %v806 = vld [vmem:[#allocation2 + $0x9] sm:$0xff]
        %v807 = vld [vmem:[#allocation2 + $0x11] sm:$0xff]
        %v808 = vperm.slane %v779, 4
        %v809 = vmul.f32 %v806, %v808
        %v810 = vmul.f32 %v807, %v808
        %v811 = vadd.f32 %v804, %v809
        %v812 = vadd.f32 %v805, %v810
        %v813 = vld [vmem:[#allocation2 + $0xa] sm:$0xff]
        %v814 = vld [vmem:[#allocation2 + $0x12] sm:$0xff]
        %v815 = vperm.slane %v779, 5
        %v816 = vmul.f32 %v813, %v815
        %v817 = vmul.f32 %v814, %v815
        %v818 = vadd.f32 %v811, %v816
        %v819 = vadd.f32 %v812, %v817
        %v820 = vld [vmem:[#allocation2 + $0xb] sm:$0xff]
        %v821 = vld [vmem:[#allocation2 + $0x13] sm:$0xff]
        %v822 = vperm.slane %v779, 6
        %v823 = vmul.f32 %v820, %v822
        %v824 = vmul.f32 %v821, %v822
        %v825 = vadd.f32 %v818, %v823
        %v826 = vadd.f32 %v819, %v824
        %v827 = vld [vmem:[%s7] sm:$0x1]
        %v829 = vperm.slane %v827, 0
        %v831 = vadd.f32 %v825, %v829
        %v832 = vadd.f32 %v826, %v829
        %v833 = vxor.u32 %v831, 2147483648
        %v834 = vxor.u32 %v832, 2147483648
        %v835 = vmul.f32 %v833, 1.442695
        %v836 = vpow.pop %v835
        %v837 = vmul.f32 %v834, 1.442695
        %v838 = vpow.pop %v837
        %v839 = vadd.f32 %v836, 1.0
        %v840 = vadd.f32 %v838, 1.0
        %v841 = vrcp.pop %v839
        %v842 = vmul.f32 %v839, %v841
        %v843 = vsub.f32 1.0, %v842
        %v844 = vmul.f32 %v841, %v843
        %v845 = vadd.f32 %v841, %v844
        %vm846 = vweird.f32 %v839
        %vm847 = vweird.f32 %v841
        %vm848 = vmor %vm846, %vm847
        %v849 = vsel %vm848, %v841, %v845
        %v850 = vand.u32 2147483647, %v839
        %vm851 = vcmp.eq.f32.partialorder %v850, 8.507059e+37
        %v852 = vand.u32 %v839, 2147483648
        %v853 = vor.u32 1.1754944e-38, %v852
        %v854 = vsel %vm851, %v853, %v849
        %v855 = vmul.f32 1.0, %v854
        %v856 = vrcp.pop %v840
        %v857 = vmul.f32 %v840, %v856
        %v858 = vsub.f32 1.0, %v857
        %v859 = vmul.f32 %v856, %v858
        %v860 = vadd.f32 %v856, %v859
        %vm861 = vweird.f32 %v840
        %vm862 = vweird.f32 %v856
        %vm863 = vmor %vm861, %vm862
        %v864 = vsel %vm863, %v856, %v860
        %v865 = vand.u32 2147483647, %v840
        %vm866 = vcmp.eq.f32.partialorder %v865, 8.507059e+37
        %v867 = vand.u32 %v840, 2147483648
        %v868 = vor.u32 1.1754944e-38, %v867
        %v869 = vsel %vm866, %v868, %v864
        %v870 = vmul.f32 1.0, %v869
        %v871 = vmul.f32 %v831, %v855
        %v872 = vmul.f32 %v832, %v870
        %v873 = vpack.c.bf16 %v872, %v871
        %v874 = vld [vmem:[%s8] sm:$0xf]
        %v875 = vld [vmem:[%s8 + $0x4] sm:$0xf]
        %v876 = vld [vmem:[%s8 + $0x8] sm:$0xf]
        %v877 = vld [vmem:[%s8 + $0xc] sm:$0xf]
        %v878 = vld [vmem:[%s9] sm:$0x1]
        %v880 = vperm.slane %v878, 0
        %v886 = vunpack.c.l.b16 %v874
        %v887 = vunpack.c.l.b16 %v875
        %v888 = vunpack.c.l.b16 %v876
        %v889 = vunpack.c.l.b16 %v877
        %v890 = vpack.c.b16 %v887, %v886
        %v891 = vpack.c.b16 %v889, %v888
        %v895 = vsel %vm487, %v873, 0
        %897 = vmatpush.bf16.msra.mxu0 0
        %898 = vmatpush.bf16.msra.mxu0 0
        %899 = vmatpush.bf16.msra.mxu0 0
        %900 = vmatpush.bf16.msra.mxu0 0
        %901 = vmatpush.bf16.msra.mxu0 0
        %902 = vmatpush.bf16.msra.mxu0 0
        %903 = vmatpush.bf16.msra.mxu0 %v891
        %904 = vmatpush.bf16.msra.mxu0 %v890
        %905 = vmatmul.bf16.gmra.mxu0 %v895
        %v906 = vpop.f32.mrf.mxu0
        %v907 = vadd.f32 %v880, %v906
        %v908 = vpop.f32.mrf.mxu0
        %v909 = vadd.f32 %v880, %v908
        %910 = vdwg.mxu0
        %v911 = vadd.f32 %v907, %v485
        %v912 = vadd.f32 %v909, %v486
        %913 = vst.msk [vmem:[%s475] sm:$0xff] %vm487, %v911
        %914 = vst.msk [vmem:[%s475 + $0x8] sm:$0xff] %vm487, %v912
        %s915 = sand.u32 %s275, 1
        %s916 = scalar_lea.sflag [#allocation5], %s915
        %s917 = sand.u32 %s275, 1
        %s918 = smul.addr %s917, 16
        %s919 = scalar_lea.vmem [#allocation12], %s918
        // Predicated region
        $region81: #{tpu_custom_call.1} parent=59 // pred_check
          %p920 = pneg %p285
        $region82: #{tpu_custom_call.1} parent=59 // pred_check_branch
          %922 = sbr.rel (%p920) target = $region84
        $region83: #{tpu_custom_call.1} parent=59 // pred_region
          %s923 = smul.u32 2, %s34
          %925 = vsyncadd %s916, 0
          %s926 = smul.addr %s33, 2
          %s927 = sadd.s32 %s923, %s926
          %s928 = smul.addr %s927, 8
          %s929 = scalar_lea.hbm %s10, %s928
          %s930 = sshll.u32 %s919, 4
          %s931 = int_to_ptr.vmem [resolvable:$true] %s930
          %s932 = sshll.u32 %s929, 4
          %s933 = int_to_ptr.hbm [resolvable:$true] %s932
          %938 = dma.vmem_to_hbm [thread:$0]  %s931, 256, %s933, %s916, 128, 128, 8
        $region84: #{tpu_custom_call.1} parent=59 // pred_fallthru
          _
      $region60: #{tpu_custom_call.1} parent=5 // pred_fallthru
        _
      %p939 = scmp.le.s32.totalorder 2, %s24
      // Predicated region
      $region85: #{tpu_custom_call.1} parent=5 // pred_check
        %p940 = pneg %p939
      $region86: #{tpu_custom_call.1} parent=5 // pred_check_branch
        %942 = sbr.rel (%p940) target = $region88
      $region87: #{tpu_custom_call.1} parent=5 // pred_region
        %s943 = ssub.s32 %s24, 2
        // Predicated region
        $region89: #{tpu_custom_call.1} parent=87 // pred_check
          %p944 = pneg %p291
        $region90: #{tpu_custom_call.1} parent=87 // pred_check_branch
          %946 = sbr.rel (%p944) target = $region92
        $region91: #{tpu_custom_call.1} parent=87 // pred_region
          %s947 = sand.u32 %s276, 1
          %s948 = scalar_lea.sflag [#allocation5], %s947
          %s949 = sand.u32 %s276, 1
          %s950 = smul.addr %s949, 16
          %s951 = scalar_lea.vmem [#allocation12], %s950
          %953 = dma.done %s948, 256
        $region92: #{tpu_custom_call.1} parent=87 // pred_fallthru
          _
      $region88: #{tpu_custom_call.1} parent=5 // pred_fallthru
        _
    $region6: #{tpu_custom_call.1} parent=1 // loop_footer
      %s28 = sadd.s32 1, %s24
    $region7: #{tpu_custom_call.1} parent=1 // loop_footer_branch
      %23 = sbr.rel target = $region3
    $region8: #{tpu_custom_call.1} parent=1 // loop_exit
      _
    %954 = vsyncpa [#allocation4], 1
    %s955 = scalar_lea.sflag [#allocation4], 1
    %956 = vsyncpa %s955, 1
    %957 = vsyncpa [#allocation7], 1
    %958 = vsyncpa [#allocation10], 1
    %959 = vsyncpa [#allocation5], 1
    %s960 = scalar_lea.sflag [#allocation5], 1
    %961 = vsyncpa %s960, 1

</llo_original>
